<compile_context>
chip_gen: v6e
topology: v6e:2x2x1
jax: 0.10.0
libtpu: 0.0.40
codegen_flags: <defaults>
</compile_context>

<pallas_src>
import functools

import jax
import jax.numpy as jnp
from jax.experimental import pallas as pl
from jax.experimental.pallas import tpu as pltpu

_LANE = 128


def _round_up(x, m):
    return ((x + m - 1) // m) * m


def _generator_mlp_kernel(z_ref,
                          w1_ref, b1_ref,
                          w2_ref, b2_ref,
                          w3_ref, b3_ref,
                          w4_ref, b4_ref,
                          out_ref):
    """One batch tile of the fused 4-layer MLP: (Linear+ReLU) x3 -> Linear -> Tanh.

    Weights are bf16 and VMEM-resident across all grid steps (constant
    index_maps).  Matmul inputs are bf16 (MXU-native on v6e/v7x), accumulation
    and all elementwise math (bias add, ReLU, tanh) are f32; the result is
    stored as bf16 — tanh output lies in [-1, 1], so bf16 is plenty and it
    halves the HBM writeback, the dominant cost of this kernel.
    """
    x = z_ref[...].astype(jnp.bfloat16)

    h = jnp.dot(x, w1_ref[...], preferred_element_type=jnp.float32) + b1_ref[...]
    h = jnp.maximum(h, 0.0)

    h = jnp.dot(h.astype(jnp.bfloat16), w2_ref[...],
                preferred_element_type=jnp.float32) + b2_ref[...]
    h = jnp.maximum(h, 0.0)

    h = jnp.dot(h.astype(jnp.bfloat16), w3_ref[...],
                preferred_element_type=jnp.float32) + b3_ref[...]
    h = jnp.maximum(h, 0.0)

    h = jnp.dot(h.astype(jnp.bfloat16), w4_ref[...],
                preferred_element_type=jnp.float32) + b4_ref[...]
    # tanh in f32 (safe on v5e's f32-only EUP); bf16 store halves writeback.
    out_ref[...] = jnp.tanh(h).astype(out_ref.dtype)


def init_generator_params(key, num_channels, latent_dim, hidden_dim):
    """Deterministic init matching the PyTorch module's layer shapes.

    PyTorch nn.Linear default init: U(-1/sqrt(fan_in), +1/sqrt(fan_in)) for both
    weight and bias.  Weights are stored transposed as (in, out) for the kernel.
    """
    dims = [latent_dim, hidden_dim * 8, hidden_dim * 4, hidden_dim * 2,
            32 * 32 * num_channels]
    params = []
    keys = jax.random.split(key, 2 * (len(dims) - 1))
    for i in range(len(dims) - 1):
        fan_in, fan_out = dims[i], dims[i + 1]
        bound = 1.0 / (fan_in ** 0.5)
        w = jax.random.uniform(keys[2 * i], (fan_in, fan_out),
                               minval=-bound, maxval=bound, dtype=jnp.float32)
        b = jax.random.uniform(keys[2 * i + 1], (1, fan_out),
                               minval=-bound, maxval=bound, dtype=jnp.float32)
        params.append((w, b))
    return params


def prepare_generator_params(params):
    """One-time parameter prep (hoisted out of the per-call forward).

    Lane-pads hidden dims to multiples of 128 and casts weights to bf16.
    Zero padding is numerically exact (ReLU(0)=0, zero weight rows contribute
    0).  Biases stay f32 — they are added to the f32 MXU accumulator.
    """
    (w1, b1), (w2, b2), (w3, b3), (w4, b4) = params

    def pad_cols(w, b, d):
        pc = d - w.shape[1]
        if pc:
            w = jnp.pad(w, ((0, 0), (0, pc)))
            b = jnp.pad(b, ((0, 0), (0, pc)))
        return w, b

    def pad_rows(w, d):
        pr = d - w.shape[0]
        if pr:
            w = jnp.pad(w, ((0, pr), (0, 0)))
        return w

    d1 = _round_up(w1.shape[1], _LANE)
    d2 = _round_up(w2.shape[1], _LANE)
    d3 = _round_up(w3.shape[1], _LANE)
    w1, b1 = pad_cols(w1, b1, d1)
    w2 = pad_rows(w2, d1)
    w2, b2 = pad_cols(w2, b2, d2)
    w3 = pad_rows(w3, d2)
    w3, b3 = pad_cols(w3, b3, d3)
    w4 = pad_rows(w4, d3)

    # bf16 weights: MXU-native on v6e/v7x, half the VMEM / DMA bytes everywhere.
    w1, w2, w3, w4 = (w.astype(jnp.bfloat16) for w in (w1, w2, w3, w4))
    return ((w1, b1), (w2, b2), (w3, b3), (w4, b4))


@functools.partial(jax.jit, static_argnames=("num_channels", "out_dtype"))
def generator_mlp_forward(z, prepared_params, num_channels,
                          out_dtype=jnp.float32):
    """Forward pass of GeneratorMLP.  z: (B, latent_dim) float32.

    Returns (B, num_channels, 32, 32) NCHW in `out_dtype` (float32 by default,
    matching the PyTorch module; pass jnp.bfloat16 to skip the final upcast).
    """
    (w1, b1), (w2, b2), (w3, b3), (w4, b4) = prepared_params
    B, Dz = z.shape
    out_dim = w4.shape[1]  # 32*32*num_channels, always a multiple of 128
    d1, d2, d3 = w1.shape[1], w2.shape[1], w3.shape[1]

    # ---- batch tiling ----------------------------------------------------
    # Aim for >=2 grid steps (keeps both v7x TensorCores busy under
    # dimension_semantics=("parallel",)); cap tiles at 512 rows — big enough to
    # amortise the ~0.35us/step overhead, small enough to stay comfortably in
    # VMEM on every generation now that the output tile is bf16.
    TM = min(512, max(8, _round_up((B + 1) // 2, 8)))
    Bp = _round_up(B, TM)
    z_pad = jnp.pad(z, ((0, Bp - B), (0, 0))) if Bp != B else z

    def resident(shape):
        # Constant block index -> DMA'd once, stays live in VMEM across steps.
        return pl.BlockSpec(shape, lambda i: (0, 0))

    weight_bytes = sum(int(a.size) * a.dtype.itemsize
                       for a in (w1, b1, w2, b2, w3, b3, w4, b4))

    # Advisory cost model so XLA schedules the surrounding pad/convert/reshape
    # ops around the custom call instead of serialising them.
    cost = pl.CostEstimate(
        flops=2 * Bp * (Dz * d1 + d1 * d2 + d2 * d3 + d3 * out_dim),
        transcendentals=Bp * out_dim,
        bytes_accessed=Bp * Dz * 4 + Bp * out_dim * 2 + weight_bytes)

    # VMEM budget from the real buffers (double-buffered z/out tiles, resident
    # weights, f32 activation scratch) with 2x headroom, clamped well inside
    # every generation's physical VMEM (v7x: 64 MiB per TensorCore).
    est_vmem = (2 * TM * Dz * 4            # z tiles (f32, double-buffered)
                + 2 * TM * out_dim * 2     # out tiles (bf16, double-buffered)
                + 2 * weight_bytes         # resident weights/biases
                + TM * (d1 + d2 + d3 + out_dim) * 4)  # f32 activation scratch
    vmem_limit = int(min(48 * 2**20, max(32 * 2**20, 2 * est_vmem)))

    flat = pl.pallas_call(
        _generator_mlp_kernel,
        out_shape=jax.ShapeDtypeStruct((Bp, out_dim), jnp.bfloat16),
        grid=(Bp // TM,),
        in_specs=[
            pl.BlockSpec((TM, Dz), lambda i: (i, 0)),
            resident(w1.shape), resident(b1.shape),
            resident(w2.shape), resident(b2.shape),
            resident(w3.shape), resident(b3.shape),
            resident(w4.shape), resident(b4.shape),
        ],
        out_specs=pl.BlockSpec((TM, out_dim), lambda i: (i, 0)),
        compiler_params=pltpu.CompilerParams(
            dimension_semantics=("parallel",),   # batch tiles across v7x's 2 TCs
            vmem_limit_bytes=vmem_limit),
        cost_estimate=cost,
    )(z_pad, w1, b1, w2, b2, w3, b3, w4, b4)

    # Slice off padded batch rows, restore NCHW and the f32 public contract.
    # XLA fuses slice + convert + reshape into one pass over the bf16 output.
    return flat[:B].astype(out_dtype).reshape(B, num_channels, 32, 32)


def _reference_forward(z, params, num_channels):
    """Plain-JAX f32 reference mirroring the PyTorch forward."""
    (w1, b1), (w2, b2), (w3, b3), (w4, b4) = params
    h = jnp.maximum(z @ w1 + b1, 0.0)
    h = jnp.maximum(h @ w2 + b2, 0.0)
    h = jnp.maximum(h @ w3 + b3, 0.0)
    h = jnp.tanh(h @ w4 + b4)
    return h.reshape(z.shape[0], num_channels, 32, 32)


# TODO(synk): save()/restore() checkpoint file I/O from the PyTorch module has no
# Pallas equivalent and is intentionally not implemented.

if __name__ == "__main__":
    num_channels = 1
    latent_dim = 16
    hidden_dim = 32

    key = jax.random.PRNGKey(0)
    k_param, k_z1, k_z2 = jax.random.split(key, 3)
    raw_params = init_generator_params(k_param, num_channels, latent_dim,
                                       hidden_dim)
    params = prepare_generator_params(raw_params)   # one-time pad + bf16 cast

    # Small demo shape (B=2): single tiny tile, launch-latency bound.
    z = jax.random.normal(k_z1, (2, latent_dim), dtype=jnp.float32)
    out = jax.block_until_ready(generator_mlp_forward(z, params, num_channels))
    assert out.shape == (2, num_channels, 32, 32), out.shape
    assert out.dtype == jnp.float32
    ref = _reference_forward(z, raw_params, num_channels)
    # bf16 matmul operands + bf16 store -> relaxed tolerance vs f32 reference.
    assert jnp.allclose(out, ref, atol=3e-2, rtol=3e-2), \
        float(jnp.max(jnp.abs(out - ref)))

    # Larger, non-multiple batch: exercises the 2-tile grid (TM=152, Bp=304 ->
    # both TCs busy on v7x) and the padded-row slicing.
    z_big = jax.random.normal(k_z2, (300, latent_dim), dtype=jnp.float32)
    out_big = jax.block_until_ready(
        generator_mlp_forward(z_big, params, num_channels))
    ref_big = _reference_forward(z_big, raw_params, num_channels)
    assert out_big.shape == (300, num_channels, 32, 32), out_big.shape
    assert jnp.allclose(out_big, ref_big, atol=3e-2, rtol=3e-2), \
        float(jnp.max(jnp.abs(out_big - ref_big)))

    print("KERNEL_OK")
</pallas_src>

<mosaic_0001>
module attributes {stable_mosaic.version = 11 : i64} {
  func.func @_generator_mlp_kernel(%arg0: i32, %arg1: memref<8x16xf32, #tpu.memory_space<vmem>>, %arg2: memref<16x256xbf16, #tpu.memory_space<vmem>>, %arg3: memref<1x256xf32, #tpu.memory_space<vmem>>, %arg4: memref<256x128xbf16, #tpu.memory_space<vmem>>, %arg5: memref<1x128xf32, #tpu.memory_space<vmem>>, %arg6: memref<128x128xbf16, #tpu.memory_space<vmem>>, %arg7: memref<1x128xf32, #tpu.memory_space<vmem>>, %arg8: memref<128x1024xbf16, #tpu.memory_space<vmem>>, %arg9: memref<1x1024xf32, #tpu.memory_space<vmem>>, %arg10: memref<8x1024xbf16, #tpu.memory_space<vmem>>) attributes {dimension_semantics = [#tpu.dimension_semantics<parallel>], iteration_bounds = array<i64: 1>, scalar_prefetch = 0 : i64, scratch_operands = 0 : i64, tpu.core_type = #tpu.core_type<tc>, window_params = [{transform_indices = @transform_0, window_bounds = array<i64: 8, 16>}, {pipeline_mode = #tpu.pipeline_mode<synchronous>, transform_indices = @transform_1, window_bounds = array<i64: 16, 256>}, {pipeline_mode = #tpu.pipeline_mode<synchronous>, transform_indices = @transform_2, window_bounds = array<i64: 1, 256>}, {pipeline_mode = #tpu.pipeline_mode<synchronous>, transform_indices = @transform_3, window_bounds = array<i64: 256, 128>}, {pipeline_mode = #tpu.pipeline_mode<synchronous>, transform_indices = @transform_4, window_bounds = array<i64: 1, 128>}, {pipeline_mode = #tpu.pipeline_mode<synchronous>, transform_indices = @transform_5, window_bounds = array<i64: 128, 128>}, {pipeline_mode = #tpu.pipeline_mode<synchronous>, transform_indices = @transform_6, window_bounds = array<i64: 1, 128>}, {pipeline_mode = #tpu.pipeline_mode<synchronous>, transform_indices = @transform_7, window_bounds = array<i64: 128, 1024>}, {pipeline_mode = #tpu.pipeline_mode<synchronous>, transform_indices = @transform_8, window_bounds = array<i64: 1, 1024>}, {transform_indices = @transform_9, window_bounds = array<i64: 8, 1024>}]} {
    %c0 = arith.constant 0 : index
    %c0_0 = arith.constant 0 : index
    %0 = vector.load %arg1[%c0, %c0_0] : memref<8x16xf32, #tpu.memory_space<vmem>>, vector<8x16xf32>
    %1 = arith.truncf %0 : vector<8x16xf32> to vector<8x16xbf16>
    %c0_1 = arith.constant 0 : index
    %c0_2 = arith.constant 0 : index
    %2 = vector.load %arg2[%c0_1, %c0_2] : memref<16x256xbf16, #tpu.memory_space<vmem>>, vector<16x256xbf16>
    %cst = arith.constant dense<0.000000e+00> : vector<8x256xf32>
    %3 = tpu.matmul %1, %2, %cst {dimension_numbers = #tpu.dot_dimension_numbers<[1], [0], [0], [1], [0, 0, 1, 1], [], []>} : vector<8x16xbf16>, vector<16x256xbf16>, vector<8x256xf32> -> vector<8x256xf32>
    %c0_3 = arith.constant 0 : index
    %c0_4 = arith.constant 0 : index
    %4 = vector.load %arg3[%c0_3, %c0_4] : memref<1x256xf32, #tpu.memory_space<vmem>>, vector<1x256xf32>
    %5 = vector.broadcast %4 : vector<1x256xf32> to vector<8x256xf32>
    %6 = arith.addf %3, %5 : vector<8x256xf32>
    %cst_5 = arith.constant 0.000000e+00 : f32
    %7 = vector.broadcast %cst_5 : f32 to vector<8x256xf32>
    %8 = arith.maximumf %6, %7 : vector<8x256xf32>
    %9 = arith.truncf %8 : vector<8x256xf32> to vector<8x256xbf16>
    %c0_6 = arith.constant 0 : index
    %c0_7 = arith.constant 0 : index
    %10 = vector.load %arg4[%c0_6, %c0_7] : memref<256x128xbf16, #tpu.memory_space<vmem>>, vector<256x128xbf16>
    %cst_8 = arith.constant dense<0.000000e+00> : vector<8x128xf32>
    %11 = tpu.matmul %9, %10, %cst_8 {dimension_numbers = #tpu.dot_dimension_numbers<[1], [0], [0], [1], [0, 0, 1, 1], [], []>} : vector<8x256xbf16>, vector<256x128xbf16>, vector<8x128xf32> -> vector<8x128xf32>
    %c0_9 = arith.constant 0 : index
    %c0_10 = arith.constant 0 : index
    %12 = vector.load %arg5[%c0_9, %c0_10] : memref<1x128xf32, #tpu.memory_space<vmem>>, vector<1x128xf32>
    %13 = vector.broadcast %12 : vector<1x128xf32> to vector<8x128xf32>
    %14 = arith.addf %11, %13 : vector<8x128xf32>
    %cst_11 = arith.constant 0.000000e+00 : f32
    %15 = vector.broadcast %cst_11 : f32 to vector<8x128xf32>
    %16 = arith.maximumf %14, %15 : vector<8x128xf32>
    %17 = arith.truncf %16 : vector<8x128xf32> to vector<8x128xbf16>
    %c0_12 = arith.constant 0 : index
    %c0_13 = arith.constant 0 : index
    %18 = vector.load %arg6[%c0_12, %c0_13] : memref<128x128xbf16, #tpu.memory_space<vmem>>, vector<128x128xbf16>
    %cst_14 = arith.constant dense<0.000000e+00> : vector<8x128xf32>
    %19 = tpu.matmul %17, %18, %cst_14 {dimension_numbers = #tpu.dot_dimension_numbers<[1], [0], [0], [1], [0, 0, 1, 1], [], []>} : vector<8x128xbf16>, vector<128x128xbf16>, vector<8x128xf32> -> vector<8x128xf32>
    %c0_15 = arith.constant 0 : index
    %c0_16 = arith.constant 0 : index
    %20 = vector.load %arg7[%c0_15, %c0_16] : memref<1x128xf32, #tpu.memory_space<vmem>>, vector<1x128xf32>
    %21 = vector.broadcast %20 : vector<1x128xf32> to vector<8x128xf32>
    %22 = arith.addf %19, %21 : vector<8x128xf32>
    %cst_17 = arith.constant 0.000000e+00 : f32
    %23 = vector.broadcast %cst_17 : f32 to vector<8x128xf32>
    %24 = arith.maximumf %22, %23 : vector<8x128xf32>
    %25 = arith.truncf %24 : vector<8x128xf32> to vector<8x128xbf16>
    %c0_18 = arith.constant 0 : index
    %c0_19 = arith.constant 0 : index
    %26 = vector.load %arg8[%c0_18, %c0_19] : memref<128x1024xbf16, #tpu.memory_space<vmem>>, vector<128x1024xbf16>
    %cst_20 = arith.constant dense<0.000000e+00> : vector<8x1024xf32>
    %27 = tpu.matmul %25, %26, %cst_20 {dimension_numbers = #tpu.dot_dimension_numbers<[1], [0], [0], [1], [0, 0, 1, 1], [], []>} : vector<8x128xbf16>, vector<128x1024xbf16>, vector<8x1024xf32> -> vector<8x1024xf32>
    %c0_21 = arith.constant 0 : index
    %c0_22 = arith.constant 0 : index
    %28 = vector.load %arg9[%c0_21, %c0_22] : memref<1x1024xf32, #tpu.memory_space<vmem>>, vector<1x1024xf32>
    %29 = vector.broadcast %28 : vector<1x1024xf32> to vector<8x1024xf32>
    %30 = arith.addf %27, %29 : vector<8x1024xf32>
    %31 = math.tanh %30 : vector<8x1024xf32>
    %32 = arith.truncf %31 : vector<8x1024xf32> to vector<8x1024xbf16>
    %c0_23 = arith.constant 0 : index
    %c0_24 = arith.constant 0 : index
    %33 = vector.load %arg10[%c0_23, %c0_24] : memref<8x1024xbf16, #tpu.memory_space<vmem>>, vector<8x1024xbf16>
    tpu.vector_store %arg10[%c0_23, %c0_24], %32 {strides = array<i32>} : memref<8x1024xbf16, #tpu.memory_space<vmem>>, vector<8x1024xbf16>,
    return
  }
  func.func @transform_0(%arg0: i32) -> (i32, i32) {
    %c0_i32 = arith.constant 0 : i32
    %c0_i32_0 = arith.constant 0 : i32
    return %arg0, %c0_i32 : i32, i32
  }
  func.func @transform_1(%arg0: i32) -> (i32, i32) {
    %c0_i32 = arith.constant 0 : i32
    %c0_i32_0 = arith.constant 0 : i32
    %c0_i32_1 = arith.constant 0 : i32
    return %c0_i32, %c0_i32_0 : i32, i32
  }
  func.func @transform_2(%arg0: i32) -> (i32, i32) {
    %c0_i32 = arith.constant 0 : i32
    %c0_i32_0 = arith.constant 0 : i32
    %c0_i32_1 = arith.constant 0 : i32
    return %c0_i32, %c0_i32_0 : i32, i32
  }
  func.func @transform_3(%arg0: i32) -> (i32, i32) {
    %c0_i32 = arith.constant 0 : i32
    %c0_i32_0 = arith.constant 0 : i32
    %c0_i32_1 = arith.constant 0 : i32
    return %c0_i32, %c0_i32_0 : i32, i32
  }
  func.func @transform_4(%arg0: i32) -> (i32, i32) {
    %c0_i32 = arith.constant 0 : i32
    %c0_i32_0 = arith.constant 0 : i32
    %c0_i32_1 = arith.constant 0 : i32
    return %c0_i32, %c0_i32_0 : i32, i32
  }
  func.func @transform_5(%arg0: i32) -> (i32, i32) {
    %c0_i32 = arith.constant 0 : i32
    %c0_i32_0 = arith.constant 0 : i32
    %c0_i32_1 = arith.constant 0 : i32
    return %c0_i32, %c0_i32_0 : i32, i32
  }
  func.func @transform_6(%arg0: i32) -> (i32, i32) {
    %c0_i32 = arith.constant 0 : i32
    %c0_i32_0 = arith.constant 0 : i32
    %c0_i32_1 = arith.constant 0 : i32
    return %c0_i32, %c0_i32_0 : i32, i32
  }
  func.func @transform_7(%arg0: i32) -> (i32, i32) {
    %c0_i32 = arith.constant 0 : i32
    %c0_i32_0 = arith.constant 0 : i32
    %c0_i32_1 = arith.constant 0 : i32
    return %c0_i32, %c0_i32_0 : i32, i32
  }
  func.func @transform_8(%arg0: i32) -> (i32, i32) {
    %c0_i32 = arith.constant 0 : i32
    %c0_i32_0 = arith.constant 0 : i32
    %c0_i32_1 = arith.constant 0 : i32
    return %c0_i32, %c0_i32_0 : i32, i32
  }
  func.func @transform_9(%arg0: i32) -> (i32, i32) {
    %c0_i32 = arith.constant 0 : i32
    %c0_i32_0 = arith.constant 0 : i32
    return %arg0, %c0_i32 : i32, i32
  }
}

</mosaic_0001>

<llo_original>
// kernel: generator_mlp_forward.1
$region0: #{generator_mlp_forward.1}
  #allocation0 [shape = 'u32[]', space=smem, size = 0x4, offset = 0x4, fixed_abs, tag = 'smem constant byte address 0x4 - core index']
  #allocation1 [shape = 'u32[144,128]{1,0:T(1,128)}', space=vmem, size = 0x12000, scoped, tag = 'internal scratch']
  %s0 = inlined_call_operand.vmem [shape: f32[8,16], index: 0, kind: input, shape index: {}]
  %s1 = inlined_call_operand.hbm [shape: bf16[16,256], index: 1, kind: input, shape index: {}]
  %s2 = inlined_call_operand.vmem [shape: f32[1,256], index: 2, kind: input, shape index: {}]
  %s3 = inlined_call_operand.hbm [shape: bf16[256,128], index: 3, kind: input, shape index: {}]
  %s4 = inlined_call_operand.vmem [shape: f32[1,128], index: 4, kind: input, shape index: {}]
  %s5 = inlined_call_operand.hbm [shape: bf16[128,128], index: 5, kind: input, shape index: {}]
  %s6 = inlined_call_operand.vmem [shape: f32[1,128], index: 6, kind: input, shape index: {}]
  %s7 = inlined_call_operand.hbm [shape: bf16[128,1024], index: 7, kind: input, shape index: {}]
  %s8 = inlined_call_operand.vmem [shape: f32[1,1024], index: 8, kind: input, shape index: {}]
  %s9 = inlined_call_operand.vmem [shape: bf16[8,1024], index: 9, kind: output, shape index: {}]
  %s10 = sld [smem:[#allocation0]]
  $region62: #{generator_mlp_forward.1} parent=0
    _
  %s12 = ssub.s32 1, %s10
  %s13 = scalar_select 0, %s12, %s10
  $region1: #{generator_mlp_forward.1} parent=0
    #allocation2 [shape = 'u8[8192]{0}', space=vmem, size = 0x2000, scoped, tag = 'input window, operand 1, single buffered']
    #allocation3 [shape = 's32[1]{0}', space=sflag, size = 0x4, scoped, tag = 'scoped memory for generator_mlp_forward.1']
    #allocation4 [shape = 'u8[65536]{0}', space=vmem, size = 0x10000, scoped, tag = 'input window, operand 3, single buffered']
    #allocation5 [shape = 's32[1]{0}', space=sflag, size = 0x4, scoped, tag = 'scoped memory for generator_mlp_forward.1']
    #allocation6 [shape = 'u8[32768]{0}', space=vmem, size = 0x8000, scoped, tag = 'input window, operand 5, single buffered']
    #allocation7 [shape = 'u8[262144]{0}', space=vmem, size = 0x40000, scoped, tag = 'input window, operand 7, single buffered']
    #allocation8 [shape = 's32[1]{0}', space=sflag, size = 0x4, scoped, tag = 'scoped memory for generator_mlp_forward.1']
    %14 = vsyncpa [#allocation3], 0
    %15 = vsyncpa [#allocation5], 0
    %16 = vsyncpa [#allocation8], 0
    // Predicated region
    $region2: #{generator_mlp_forward.1} parent=1 // pred_check
      _
    $region3: #{generator_mlp_forward.1} parent=1 // pred_check_branch
      %18 = sbr.rel (0) target = $region5
    $region4: #{generator_mlp_forward.1} parent=1 // pred_region
      _
    $region5: #{generator_mlp_forward.1} parent=1 // pred_fallthru
      _
    // Predicated region
    $region6: #{generator_mlp_forward.1} parent=1 // pred_check
      _
    $region7: #{generator_mlp_forward.1} parent=1 // pred_check_branch
      %20 = sbr.rel (0) target = $region9
    $region8: #{generator_mlp_forward.1} parent=1 // pred_region
      %s22 = ssub.s32 256, 256
      %23 = vsyncadd [#allocation3], %s22
      %s24 = sshll.u32 [#allocation2], 4
      %s25 = int_to_ptr.vmem [resolvable:$true] %s24
      %30 = dma.hbm_to_vmem [thread:$0]  %s1, 256, %s25, [#allocation3], 128, 128, 8
    $region9: #{generator_mlp_forward.1} parent=1 // pred_fallthru
      _
    // Predicated region
    $region10: #{generator_mlp_forward.1} parent=1 // pred_check
      _
    $region11: #{generator_mlp_forward.1} parent=1 // pred_check_branch
      %32 = sbr.rel (0) target = $region13
    $region12: #{generator_mlp_forward.1} parent=1 // pred_region
      _
    $region13: #{generator_mlp_forward.1} parent=1 // pred_fallthru
      _
    // Predicated region
    $region14: #{generator_mlp_forward.1} parent=1 // pred_check
      _
    $region15: #{generator_mlp_forward.1} parent=1 // pred_check_branch
      %34 = sbr.rel (0) target = $region17
    $region16: #{generator_mlp_forward.1} parent=1 // pred_region
      %s36 = ssub.s32 2048, 2048
      %37 = vsyncadd [#allocation5], %s36
      %s38 = sshll.u32 [#allocation4], 4
      %s39 = int_to_ptr.vmem [resolvable:$true] %s38
      %44 = dma.hbm_to_vmem [thread:$0]  %s3, 2048, %s39, [#allocation5], 64, 64, 4
    $region17: #{generator_mlp_forward.1} parent=1 // pred_fallthru
      _
    // Predicated region
    $region18: #{generator_mlp_forward.1} parent=1 // pred_check
      _
    $region19: #{generator_mlp_forward.1} parent=1 // pred_check_branch
      %46 = sbr.rel (0) target = $region21
    $region20: #{generator_mlp_forward.1} parent=1 // pred_region
      _
    $region21: #{generator_mlp_forward.1} parent=1 // pred_fallthru
      _
    // Predicated region
    $region22: #{generator_mlp_forward.1} parent=1 // pred_check
      _
    $region23: #{generator_mlp_forward.1} parent=1 // pred_check_branch
      %48 = sbr.rel (0) target = $region25
    $region24: #{generator_mlp_forward.1} parent=1 // pred_region
      %s50 = ssub.s32 1024, 1024
      %51 = vsyncadd [#allocation5], %s50
      %s52 = sshll.u32 [#allocation6], 4
      %s53 = int_to_ptr.vmem [resolvable:$true] %s52
      %58 = dma.hbm_to_vmem [thread:$0]  %s5, 1024, %s53, [#allocation5], 64, 64, 4
    $region25: #{generator_mlp_forward.1} parent=1 // pred_fallthru
      _
    // Predicated region
    $region26: #{generator_mlp_forward.1} parent=1 // pred_check
      _
    $region27: #{generator_mlp_forward.1} parent=1 // pred_check_branch
      %60 = sbr.rel (0) target = $region29
    $region28: #{generator_mlp_forward.1} parent=1 // pred_region
      _
    $region29: #{generator_mlp_forward.1} parent=1 // pred_fallthru
      _
    // Predicated region
    $region30: #{generator_mlp_forward.1} parent=1 // pred_check
      _
    $region31: #{generator_mlp_forward.1} parent=1 // pred_check_branch
      %62 = sbr.rel (0) target = $region33
    $region32: #{generator_mlp_forward.1} parent=1 // pred_region
      %s64 = ssub.s32 8192, 8192
      %65 = vsyncadd [#allocation8], %s64
      %s66 = sshll.u32 [#allocation7], 4
      %s67 = int_to_ptr.vmem [resolvable:$true] %s66
      %72 = dma.hbm_to_vmem [thread:$0]  %s7, 8192, %s67, [#allocation8], 512, 512, 32
    $region33: #{generator_mlp_forward.1} parent=1 // pred_fallthru
      _
    // Predicated region
    $region34: #{generator_mlp_forward.1} parent=1 // pred_check
      _
    $region35: #{generator_mlp_forward.1} parent=1 // pred_check_branch
      %74 = sbr.rel (0) target = $region37
    $region36: #{generator_mlp_forward.1} parent=1 // pred_region
      _
    $region37: #{generator_mlp_forward.1} parent=1 // pred_fallthru
      _
    // Predicated region
    $region38: #{generator_mlp_forward.1} parent=1 // pred_check
      _
    $region39: #{generator_mlp_forward.1} parent=1 // pred_check_branch
      %76 = sbr.rel (0) target = $region41
    $region40: #{generator_mlp_forward.1} parent=1 // pred_region
      %77 = dma.done [#allocation3], 256
    $region41: #{generator_mlp_forward.1} parent=1 // pred_fallthru
      _
    // Predicated region
    $region42: #{generator_mlp_forward.1} parent=1 // pred_check
      _
    $region43: #{generator_mlp_forward.1} parent=1 // pred_check_branch
      %79 = sbr.rel (0) target = $region45
    $region44: #{generator_mlp_forward.1} parent=1 // pred_region
      %80 = dma.done [#allocation5], 2048
    $region45: #{generator_mlp_forward.1} parent=1 // pred_fallthru
      _
    // Predicated region
    $region46: #{generator_mlp_forward.1} parent=1 // pred_check
      _
    $region47: #{generator_mlp_forward.1} parent=1 // pred_check_branch
      %82 = sbr.rel (0) target = $region49
    $region48: #{generator_mlp_forward.1} parent=1 // pred_region
      %83 = dma.done [#allocation5], 1024
    $region49: #{generator_mlp_forward.1} parent=1 // pred_fallthru
      _
    // Predicated region
    $region50: #{generator_mlp_forward.1} parent=1 // pred_check
      _
    $region51: #{generator_mlp_forward.1} parent=1 // pred_check_branch
      %85 = sbr.rel (0) target = $region53
    $region52: #{generator_mlp_forward.1} parent=1 // pred_region
      %86 = dma.done [#allocation8], 8192
    $region53: #{generator_mlp_forward.1} parent=1 // pred_fallthru
      _
    %v88 = vld [vmem:[%s0] sm:$0xff]
    %v89 = vpack.c.bf16 %v88, %v88
    %v90 = vld [vmem:[#allocation2] sm:$0xff]
    %v91 = vld [vmem:[#allocation2 + $0x8] sm:$0xff]
    %v92 = vld [vmem:[%s2] sm:$0x3]
    %v94 = vlaneseq
    %v95 = vshrl.u32 %v94, 7
    %v96 = vsub.s32 0, %v95
    %v97 = vrot.slane %v92, %v96
    %v98 = vlaneseq
    %v99 = vshrl.u32 %v98, 7
    %v100 = vsub.s32 1, %v99
    %v101 = vrot.slane %v92, %v100
    %v106 = vunpack.c.l.b16 %v90
    %v107 = vunpack.c.h.b16 %v90
    %v108 = vunpack.c.l.b16 %v91
    %v109 = vunpack.c.h.b16 %v91
    %v110 = vpack.c.b16 %v108, %v106
    %v111 = vpack.c.b16 %v109, %v107
    %vm114 = vcmask 130048
    %v116 = vsel %vm114, %v89, 0
    %118 = vmatprep.subr.bf16.mxu0 0
    %119 = vmatpush1.bf16.msra.mxu0 0
    %120 = vmatprep.subr.bf16.mxu0 0
    %121 = vmatpush1.bf16.msra.mxu0 0
    %122 = vmatprep.subr.bf16.mxu0 0
    %123 = vmatpush1.bf16.msra.mxu0 0
    %124 = vmatprep.subr.bf16.mxu0 0
    %125 = vmatpush1.bf16.msra.mxu0 0
    %126 = vmatprep.subr.bf16.mxu0 0
    %127 = vmatpush1.bf16.msra.mxu0 0
    %128 = vmatprep.subr.bf16.mxu0 0
    %129 = vmatpush1.bf16.msra.mxu0 0
    %130 = vmatprep.subr.bf16.mxu0 0
    %131 = vmatpush1.bf16.msra.mxu0 0
    %132 = vmatprep.subr.bf16.mxu0 %v111
    %133 = vmatpush1.bf16.msra.mxu0 %v110
    %134 = vmatprep.subr.bf16.mxu0 0
    %135 = vmatpush2.bf16.msra.mxu0 0
    %136 = vmatprep.subr.bf16.mxu0 0
    %137 = vmatpush2.bf16.msra.mxu0 0
    %138 = vmatprep.subr.bf16.mxu0 0
    %139 = vmatpush2.bf16.msra.mxu0 0
    %140 = vmatprep.subr.bf16.mxu0 0
    %141 = vmatpush2.bf16.msra.mxu0 0
    %142 = vmatprep.subr.bf16.mxu0 0
    %143 = vmatpush2.bf16.msra.mxu0 0
    %144 = vmatprep.subr.bf16.mxu0 0
    %145 = vmatpush2.bf16.msra.mxu0 0
    %146 = vmatprep.subr.bf16.mxu0 0
    %147 = vmatpush2.bf16.msra.mxu0 0
    %148 = vmatprep.subr.bf16.mxu0 0
    %149 = vmatpush2.bf16.msra.mxu0 0
    %150 = vmatprep.mubr.bf16.mxu0 0
    %151 = vmatmul.mubr.bf16.gmra.mxu0 %v116
    %v152 = vpop.f32.mrf.mxu0
    %v153 = vadd.f32 %v97, %v152
    %v154 = vpop.f32.mrf.mxu0
    %v155 = vadd.f32 %v101, %v154
    %v156 = vpop.f32.mrf.mxu0
    %v157 = vpop.f32.mrf.mxu0
    %158 = vdwg.mxu0
    %v159 = vmax.f32 %v153, 0.0
    %v160 = vmax.f32 %v155, 0.0
    %v161 = vpack.c.bf16 %v159, %v159
    %v162 = vpack.c.bf16 %v160, %v160
    %v163 = vld [vmem:[#allocation4] sm:$0xf]
    %v164 = vld [vmem:[#allocation4 + $0x4] sm:$0xf]
    %v165 = vld [vmem:[#allocation4 + $0x8] sm:$0xf]
    %v166 = vld [vmem:[#allocation4 + $0xc] sm:$0xf]
    %v167 = vld [vmem:[#allocation4 + $0x10] sm:$0xf]
    %v168 = vld [vmem:[#allocation4 + $0x14] sm:$0xf]
    %v169 = vld [vmem:[#allocation4 + $0x18] sm:$0xf]
    %v170 = vld [vmem:[#allocation4 + $0x1c] sm:$0xf]
    %v171 = vld [vmem:[#allocation4 + $0x20] sm:$0xf]
    %v172 = vld [vmem:[#allocation4 + $0x24] sm:$0xf]
    %v173 = vld [vmem:[#allocation4 + $0x28] sm:$0xf]
    %v174 = vld [vmem:[#allocation4 + $0x2c] sm:$0xf]
    %v175 = vld [vmem:[#allocation4 + $0x30] sm:$0xf]
    %v176 = vld [vmem:[#allocation4 + $0x34] sm:$0xf]
    %v177 = vld [vmem:[#allocation4 + $0x38] sm:$0xf]
    %v178 = vld [vmem:[#allocation4 + $0x3c] sm:$0xf]
    %v179 = vld [vmem:[#allocation4 + $0x40] sm:$0xf]
    %v180 = vld [vmem:[#allocation4 + $0x44] sm:$0xf]
    %v181 = vld [vmem:[#allocation4 + $0x48] sm:$0xf]
    %v182 = vld [vmem:[#allocation4 + $0x4c] sm:$0xf]
    %v183 = vld [vmem:[#allocation4 + $0x50] sm:$0xf]
    %v184 = vld [vmem:[#allocation4 + $0x54] sm:$0xf]
    %v185 = vld [vmem:[#allocation4 + $0x58] sm:$0xf]
    %v186 = vld [vmem:[#allocation4 + $0x5c] sm:$0xf]
    %v187 = vld [vmem:[#allocation4 + $0x60] sm:$0xf]
    %v188 = vld [vmem:[#allocation4 + $0x64] sm:$0xf]
    %v189 = vld [vmem:[#allocation4 + $0x68] sm:$0xf]
    %v190 = vld [vmem:[#allocation4 + $0x6c] sm:$0xf]
    %v191 = vld [vmem:[#allocation4 + $0x70] sm:$0xf]
    %v192 = vld [vmem:[#allocation4 + $0x74] sm:$0xf]
    %v193 = vld [vmem:[#allocation4 + $0x78] sm:$0xf]
    %v194 = vld [vmem:[#allocation4 + $0x7c] sm:$0xf]
    %v195 = vld [vmem:[%s4] sm:$0x1]
    %v197 = vlaneseq
    %v198 = vshrl.u32 %v197, 7
    %v199 = vsub.s32 0, %v198
    %v200 = vrot.slane %v195, %v199
    %v234 = vunpack.c.l.b16 %v163
    %v235 = vunpack.c.l.b16 %v164
    %v236 = vunpack.c.l.b16 %v165
    %v237 = vunpack.c.l.b16 %v166
    %v238 = vunpack.c.l.b16 %v167
    %v239 = vunpack.c.l.b16 %v168
    %v240 = vunpack.c.l.b16 %v169
    %v241 = vunpack.c.l.b16 %v170
    %v242 = vunpack.c.l.b16 %v171
    %v243 = vunpack.c.l.b16 %v172
    %v244 = vunpack.c.l.b16 %v173
    %v245 = vunpack.c.l.b16 %v174
    %v246 = vunpack.c.l.b16 %v175
    %v247 = vunpack.c.l.b16 %v176
    %v248 = vunpack.c.l.b16 %v177
    %v249 = vunpack.c.l.b16 %v178
    %v250 = vunpack.c.l.b16 %v179
    %v251 = vunpack.c.l.b16 %v180
    %v252 = vunpack.c.l.b16 %v181
    %v253 = vunpack.c.l.b16 %v182
    %v254 = vunpack.c.l.b16 %v183
    %v255 = vunpack.c.l.b16 %v184
    %v256 = vunpack.c.l.b16 %v185
    %v257 = vunpack.c.l.b16 %v186
    %v258 = vunpack.c.l.b16 %v187
    %v259 = vunpack.c.l.b16 %v188
    %v260 = vunpack.c.l.b16 %v189
    %v261 = vunpack.c.l.b16 %v190
    %v262 = vunpack.c.l.b16 %v191
    %v263 = vunpack.c.l.b16 %v192
    %v264 = vunpack.c.l.b16 %v193
    %v265 = vunpack.c.l.b16 %v194
    %v266 = vpack.c.b16 %v235, %v234
    %v267 = vpack.c.b16 %v237, %v236
    %v268 = vpack.c.b16 %v239, %v238
    %v269 = vpack.c.b16 %v241, %v240
    %v270 = vpack.c.b16 %v243, %v242
    %v271 = vpack.c.b16 %v245, %v244
    %v272 = vpack.c.b16 %v247, %v246
    %v273 = vpack.c.b16 %v249, %v248
    %v274 = vpack.c.b16 %v251, %v250
    %v275 = vpack.c.b16 %v253, %v252
    %v276 = vpack.c.b16 %v255, %v254
    %v277 = vpack.c.b16 %v257, %v256
    %v278 = vpack.c.b16 %v259, %v258
    %v279 = vpack.c.b16 %v261, %v260
    %v280 = vpack.c.b16 %v263, %v262
    %v281 = vpack.c.b16 %v265, %v264
    %298 = vmatprep.subr.bf16.mxu0 0
    %299 = vmatpush1.bf16.msra.mxu0 %v273
    %300 = vmatprep.subr.bf16.mxu0 0
    %301 = vmatpush1.bf16.msra.mxu0 %v272
    %302 = vmatprep.subr.bf16.mxu0 0
    %303 = vmatpush1.bf16.msra.mxu0 %v271
    %304 = vmatprep.subr.bf16.mxu0 0
    %305 = vmatpush1.bf16.msra.mxu0 %v270
    %306 = vmatprep.subr.bf16.mxu0 0
    %307 = vmatpush1.bf16.msra.mxu0 %v269
    %308 = vmatprep.subr.bf16.mxu0 0
    %309 = vmatpush1.bf16.msra.mxu0 %v268
    %310 = vmatprep.subr.bf16.mxu0 0
    %311 = vmatpush1.bf16.msra.mxu0 %v267
    %312 = vmatprep.subr.bf16.mxu0 0
    %313 = vmatpush1.bf16.msra.mxu0 %v266
    %314 = vmatprep.subr.bf16.mxu0 0
    %315 = vmatpush2.bf16.msra.mxu0 %v281
    %316 = vmatprep.subr.bf16.mxu0 0
    %317 = vmatpush2.bf16.msra.mxu0 %v280
    %318 = vmatprep.subr.bf16.mxu0 0
    %319 = vmatpush2.bf16.msra.mxu0 %v279
    %320 = vmatprep.subr.bf16.mxu0 0
    %321 = vmatpush2.bf16.msra.mxu0 %v278
    %322 = vmatprep.subr.bf16.mxu0 0
    %323 = vmatpush2.bf16.msra.mxu0 %v277
    %324 = vmatprep.subr.bf16.mxu0 0
    %325 = vmatpush2.bf16.msra.mxu0 %v276
    %326 = vmatprep.subr.bf16.mxu0 0
    %327 = vmatpush2.bf16.msra.mxu0 %v275
    %328 = vmatprep.subr.bf16.mxu0 0
    %329 = vmatpush2.bf16.msra.mxu0 %v274
    %330 = vmatprep.mubr.bf16.mxu0 %v162
    %331 = vmatmul.mubr.bf16.gmra.mxu0 %v161
    %v332 = vpop.f32.mrf.mxu0
    %v333 = vadd.f32 %v200, %v332
    %v334 = vpop.f32.mrf.mxu0
    %v335 = vpop.f32.mrf.mxu0
    %v336 = vpop.f32.mrf.mxu0
    %337 = vdwg.mxu0
    %v338 = vmax.f32 %v333, 0.0
    %v339 = vpack.c.bf16 %v338, %v338
    %v340 = vld [vmem:[#allocation6] sm:$0xf]
    %v341 = vld [vmem:[#allocation6 + $0x4] sm:$0xf]
    %v342 = vld [vmem:[#allocation6 + $0x8] sm:$0xf]
    %v343 = vld [vmem:[#allocation6 + $0xc] sm:$0xf]
    %v344 = vld [vmem:[#allocation6 + $0x10] sm:$0xf]
    %v345 = vld [vmem:[#allocation6 + $0x14] sm:$0xf]
    %v346 = vld [vmem:[#allocation6 + $0x18] sm:$0xf]
    %v347 = vld [vmem:[#allocation6 + $0x1c] sm:$0xf]
    %v348 = vld [vmem:[#allocation6 + $0x20] sm:$0xf]
    %v349 = vld [vmem:[#allocation6 + $0x24] sm:$0xf]
    %v350 = vld [vmem:[#allocation6 + $0x28] sm:$0xf]
    %v351 = vld [vmem:[#allocation6 + $0x2c] sm:$0xf]
    %v352 = vld [vmem:[#allocation6 + $0x30] sm:$0xf]
    %v353 = vld [vmem:[#allocation6 + $0x34] sm:$0xf]
    %v354 = vld [vmem:[#allocation6 + $0x38] sm:$0xf]
    %v355 = vld [vmem:[#allocation6 + $0x3c] sm:$0xf]
    %v356 = vld [vmem:[%s6] sm:$0x1]
    %v358 = vlaneseq
    %v359 = vshrl.u32 %v358, 7
    %v360 = vsub.s32 0, %v359
    %v361 = vrot.slane %v356, %v360
    %v379 = vunpack.c.l.b16 %v340
    %v380 = vunpack.c.l.b16 %v341
    %v381 = vunpack.c.l.b16 %v342
    %v382 = vunpack.c.l.b16 %v343
    %v383 = vunpack.c.l.b16 %v344
    %v384 = vunpack.c.l.b16 %v345
    %v385 = vunpack.c.l.b16 %v346
    %v386 = vunpack.c.l.b16 %v347
    %v387 = vunpack.c.l.b16 %v348
    %v388 = vunpack.c.l.b16 %v349
    %v389 = vunpack.c.l.b16 %v350
    %v390 = vunpack.c.l.b16 %v351
    %v391 = vunpack.c.l.b16 %v352
    %v392 = vunpack.c.l.b16 %v353
    %v393 = vunpack.c.l.b16 %v354
    %v394 = vunpack.c.l.b16 %v355
    %v395 = vpack.c.b16 %v380, %v379
    %v396 = vpack.c.b16 %v382, %v381
    %v397 = vpack.c.b16 %v384, %v383
    %v398 = vpack.c.b16 %v386, %v385
    %v399 = vpack.c.b16 %v388, %v387
    %v400 = vpack.c.b16 %v390, %v389
    %v401 = vpack.c.b16 %v392, %v391
    %v402 = vpack.c.b16 %v394, %v393
    %411 = vmatprep.subr.bf16.mxu0 0
    %412 = vmatpush1.bf16.msra.mxu0 %v402
    %413 = vmatprep.subr.bf16.mxu0 0
    %414 = vmatpush1.bf16.msra.mxu0 %v401
    %415 = vmatprep.subr.bf16.mxu0 0
    %416 = vmatpush1.bf16.msra.mxu0 %v400
    %417 = vmatprep.subr.bf16.mxu0 0
    %418 = vmatpush1.bf16.msra.mxu0 %v399
    %419 = vmatprep.subr.bf16.mxu0 0
    %420 = vmatpush1.bf16.msra.mxu0 %v398
    %421 = vmatprep.subr.bf16.mxu0 0
    %422 = vmatpush1.bf16.msra.mxu0 %v397
    %423 = vmatprep.subr.bf16.mxu0 0
    %424 = vmatpush1.bf16.msra.mxu0 %v396
    %425 = vmatprep.subr.bf16.mxu0 0
    %426 = vmatpush1.bf16.msra.mxu0 %v395
    %427 = vmatprep.subr.bf16.mxu0 0
    %428 = vmatpush2.bf16.msra.mxu0 0
    %429 = vmatprep.subr.bf16.mxu0 0
    %430 = vmatpush2.bf16.msra.mxu0 0
    %431 = vmatprep.subr.bf16.mxu0 0
    %432 = vmatpush2.bf16.msra.mxu0 0
    %433 = vmatprep.subr.bf16.mxu0 0
    %434 = vmatpush2.bf16.msra.mxu0 0
    %435 = vmatprep.subr.bf16.mxu0 0
    %436 = vmatpush2.bf16.msra.mxu0 0
    %437 = vmatprep.subr.bf16.mxu0 0
    %438 = vmatpush2.bf16.msra.mxu0 0
    %439 = vmatprep.subr.bf16.mxu0 0
    %440 = vmatpush2.bf16.msra.mxu0 0
    %441 = vmatprep.subr.bf16.mxu0 0
    %442 = vmatpush2.bf16.msra.mxu0 0
    %443 = vmatprep.mubr.bf16.mxu0 0
    %444 = vmatmul.mubr.bf16.gmra.mxu0 %v339
    %v445 = vpop.f32.mrf.mxu0
    %v446 = vadd.f32 %v361, %v445
    %v447 = vpop.f32.mrf.mxu0
    %v448 = vpop.f32.mrf.mxu0
    %v449 = vpop.f32.mrf.mxu0
    %450 = vdwg.mxu0
    %v451 = vmax.f32 %v446, 0.0
    %v452 = vpack.c.bf16 %v451, %v451
    %v453 = vld [vmem:[#allocation7] sm:$0xff]
    %v454 = vld [vmem:[#allocation7 + $0x8] sm:$0xff]
    %v455 = vld [vmem:[#allocation7 + $0x10] sm:$0xff]
    %v456 = vld [vmem:[#allocation7 + $0x18] sm:$0xff]
    %v457 = vld [vmem:[#allocation7 + $0x20] sm:$0xff]
    %v458 = vld [vmem:[#allocation7 + $0x28] sm:$0xff]
    %v459 = vld [vmem:[#allocation7 + $0x30] sm:$0xff]
    %v460 = vld [vmem:[#allocation7 + $0x38] sm:$0xff]
    %v461 = vld [vmem:[#allocation7 + $0x40] sm:$0xff]
    %v462 = vld [vmem:[#allocation7 + $0x48] sm:$0xff]
    %v463 = vld [vmem:[#allocation7 + $0x50] sm:$0xff]
    %v464 = vld [vmem:[#allocation7 + $0x58] sm:$0xff]
    %v465 = vld [vmem:[#allocation7 + $0x60] sm:$0xff]
    %v466 = vld [vmem:[#allocation7 + $0x68] sm:$0xff]
    %v467 = vld [vmem:[#allocation7 + $0x70] sm:$0xff]
    %v468 = vld [vmem:[#allocation7 + $0x78] sm:$0xff]
    %v469 = vld [vmem:[#allocation7 + $0x80] sm:$0xff]
    %v470 = vld [vmem:[#allocation7 + $0x88] sm:$0xff]
    %v471 = vld [vmem:[#allocation7 + $0x90] sm:$0xff]
    %v472 = vld [vmem:[#allocation7 + $0x98] sm:$0xff]
    %v473 = vld [vmem:[#allocation7 + $0xa0] sm:$0xff]
    %v474 = vld [vmem:[#allocation7 + $0xa8] sm:$0xff]
    %v475 = vld [vmem:[#allocation7 + $0xb0] sm:$0xff]
    %v476 = vld [vmem:[#allocation7 + $0xb8] sm:$0xff]
    %v477 = vld [vmem:[#allocation7 + $0xc0] sm:$0xff]
    %v478 = vld [vmem:[#allocation7 + $0xc8] sm:$0xff]
    %v479 = vld [vmem:[#allocation7 + $0xd0] sm:$0xff]
    %v480 = vld [vmem:[#allocation7 + $0xd8] sm:$0xff]
    %v481 = vld [vmem:[#allocation7 + $0xe0] sm:$0xff]
    %v482 = vld [vmem:[#allocation7 + $0xe8] sm:$0xff]
    %v483 = vld [vmem:[#allocation7 + $0xf0] sm:$0xff]
    %v484 = vld [vmem:[#allocation7 + $0xf8] sm:$0xff]
    %v485 = vld [vmem:[#allocation7 + $0x100] sm:$0xff]
    %v486 = vld [vmem:[#allocation7 + $0x108] sm:$0xff]
    %v487 = vld [vmem:[#allocation7 + $0x110] sm:$0xff]
    %v488 = vld [vmem:[#allocation7 + $0x118] sm:$0xff]
    %v489 = vld [vmem:[#allocation7 + $0x120] sm:$0xff]
    %v490 = vld [vmem:[#allocation7 + $0x128] sm:$0xff]
    %v491 = vld [vmem:[#allocation7 + $0x130] sm:$0xff]
    %v492 = vld [vmem:[#allocation7 + $0x138] sm:$0xff]
    %v493 = vld [vmem:[#allocation7 + $0x140] sm:$0xff]
    %v494 = vld [vmem:[#allocation7 + $0x148] sm:$0xff]
    %v495 = vld [vmem:[#allocation7 + $0x150] sm:$0xff]
    %v496 = vld [vmem:[#allocation7 + $0x158] sm:$0xff]
    %v497 = vld [vmem:[#allocation7 + $0x160] sm:$0xff]
    %v498 = vld [vmem:[#allocation7 + $0x168] sm:$0xff]
    %v499 = vld [vmem:[#allocation7 + $0x170] sm:$0xff]
    %v500 = vld [vmem:[#allocation7 + $0x178] sm:$0xff]
    %v501 = vld [vmem:[#allocation7 + $0x180] sm:$0xff]
    %v502 = vld [vmem:[#allocation7 + $0x188] sm:$0xff]
    %v503 = vld [vmem:[#allocation7 + $0x190] sm:$0xff]
    %v504 = vld [vmem:[#allocation7 + $0x198] sm:$0xff]
    %v505 = vld [vmem:[#allocation7 + $0x1a0] sm:$0xff]
    %v506 = vld [vmem:[#allocation7 + $0x1a8] sm:$0xff]
    %v507 = vld [vmem:[#allocation7 + $0x1b0] sm:$0xff]
    %v508 = vld [vmem:[#allocation7 + $0x1b8] sm:$0xff]
    %v509 = vld [vmem:[#allocation7 + $0x1c0] sm:$0xff]
    %v510 = vld [vmem:[#allocation7 + $0x1c8] sm:$0xff]
    %v511 = vld [vmem:[#allocation7 + $0x1d0] sm:$0xff]
    %v512 = vld [vmem:[#allocation7 + $0x1d8] sm:$0xff]
    %v513 = vld [vmem:[#allocation7 + $0x1e0] sm:$0xff]
    %v514 = vld [vmem:[#allocation7 + $0x1e8] sm:$0xff]
    %v515 = vld [vmem:[#allocation7 + $0x1f0] sm:$0xff]
    %v516 = vld [vmem:[#allocation7 + $0x1f8] sm:$0xff]
    %v517 = vld [vmem:[%s8] sm:$0xff]
    %v519 = vlaneseq
    %v520 = vshrl.u32 %v519, 7
    %v521 = vsub.s32 0, %v520
    %v522 = vrot.slane %v517, %v521
    %v523 = vlaneseq
    %v524 = vshrl.u32 %v523, 7
    %v525 = vsub.s32 1, %v524
    %v526 = vrot.slane %v517, %v525
    %v527 = vlaneseq
    %v528 = vshrl.u32 %v527, 7
    %v529 = vsub.s32 2, %v528
    %v530 = vrot.slane %v517, %v529
    %v531 = vlaneseq
    %v532 = vshrl.u32 %v531, 7
    %v533 = vsub.s32 3, %v532
    %v534 = vrot.slane %v517, %v533
    %v535 = vlaneseq
    %v536 = vshrl.u32 %v535, 7
    %v537 = vsub.s32 4, %v536
    %v538 = vrot.slane %v517, %v537
    %v539 = vlaneseq
    %v540 = vshrl.u32 %v539, 7
    %v541 = vsub.s32 5, %v540
    %v542 = vrot.slane %v517, %v541
    %v543 = vlaneseq
    %v544 = vshrl.u32 %v543, 7
    %v545 = vsub.s32 6, %v544
    %v546 = vrot.slane %v517, %v545
    %v547 = vlaneseq
    %v548 = vshrl.u32 %v547, 7
    %v549 = vsub.s32 7, %v548
    %v550 = vrot.slane %v517, %v549
    %v623 = vunpack.c.l.b16 %v453
    %v624 = vunpack.c.h.b16 %v453
    %v625 = vunpack.c.l.b16 %v454
    %v626 = vunpack.c.h.b16 %v454
    %v627 = vunpack.c.l.b16 %v455
    %v628 = vunpack.c.h.b16 %v455
    %v629 = vunpack.c.l.b16 %v456
    %v630 = vunpack.c.h.b16 %v456
    %v631 = vunpack.c.l.b16 %v457
    %v632 = vunpack.c.h.b16 %v457
    %v633 = vunpack.c.l.b16 %v458
    %v634 = vunpack.c.h.b16 %v458
    %v635 = vunpack.c.l.b16 %v459
    %v636 = vunpack.c.h.b16 %v459
    %v637 = vunpack.c.l.b16 %v460
    %v638 = vunpack.c.h.b16 %v460
    %v639 = vunpack.c.l.b16 %v461
    %v640 = vunpack.c.h.b16 %v461
    %v641 = vunpack.c.l.b16 %v462
    %v642 = vunpack.c.h.b16 %v462
    %v643 = vunpack.c.l.b16 %v463
    %v644 = vunpack.c.h.b16 %v463
    %v645 = vunpack.c.l.b16 %v464
    %v646 = vunpack.c.h.b16 %v464
    %v647 = vunpack.c.l.b16 %v465
    %v648 = vunpack.c.h.b16 %v465
    %v649 = vunpack.c.l.b16 %v466
    %v650 = vunpack.c.h.b16 %v466
    %v651 = vunpack.c.l.b16 %v467
    %v652 = vunpack.c.h.b16 %v467
    %v653 = vunpack.c.l.b16 %v468
    %v654 = vunpack.c.h.b16 %v468
    %v655 = vunpack.c.l.b16 %v469
    %v656 = vunpack.c.h.b16 %v469
    %v657 = vunpack.c.l.b16 %v470
    %v658 = vunpack.c.h.b16 %v470
    %v659 = vunpack.c.l.b16 %v471
    %v660 = vunpack.c.h.b16 %v471
    %v661 = vunpack.c.l.b16 %v472
    %v662 = vunpack.c.h.b16 %v472
    %v663 = vunpack.c.l.b16 %v473
    %v664 = vunpack.c.h.b16 %v473
    %v665 = vunpack.c.l.b16 %v474
    %v666 = vunpack.c.h.b16 %v474
    %v667 = vunpack.c.l.b16 %v475
    %v668 = vunpack.c.h.b16 %v475
    %v669 = vunpack.c.l.b16 %v476
    %v670 = vunpack.c.h.b16 %v476
    %v671 = vunpack.c.l.b16 %v477
    %v672 = vunpack.c.h.b16 %v477
    %v673 = vunpack.c.l.b16 %v478
    %v674 = vunpack.c.h.b16 %v478
    %v675 = vunpack.c.l.b16 %v479
    %v676 = vunpack.c.h.b16 %v479
    %v677 = vunpack.c.l.b16 %v480
    %v678 = vunpack.c.h.b16 %v480
    %v679 = vunpack.c.l.b16 %v481
    %v680 = vunpack.c.h.b16 %v481
    %v681 = vunpack.c.l.b16 %v482
    %v682 = vunpack.c.h.b16 %v482
    %v683 = vunpack.c.l.b16 %v483
    %v684 = vunpack.c.h.b16 %v483
    %v685 = vunpack.c.l.b16 %v484
    %v686 = vunpack.c.h.b16 %v484
    %v687 = vunpack.c.l.b16 %v485
    %v688 = vunpack.c.h.b16 %v485
    %v689 = vunpack.c.l.b16 %v486
    %v690 = vunpack.c.h.b16 %v486
    %v691 = vunpack.c.l.b16 %v487
    %v692 = vunpack.c.h.b16 %v487
    %v693 = vunpack.c.l.b16 %v488
    %v694 = vunpack.c.h.b16 %v488
    %v695 = vunpack.c.l.b16 %v489
    %v696 = vunpack.c.h.b16 %v489
    %v697 = vunpack.c.l.b16 %v490
    %v698 = vunpack.c.h.b16 %v490
    %v699 = vunpack.c.l.b16 %v491
    %v700 = vunpack.c.h.b16 %v491
    %v701 = vunpack.c.l.b16 %v492
    %v702 = vunpack.c.h.b16 %v492
    %v703 = vunpack.c.l.b16 %v493
    %v704 = vunpack.c.h.b16 %v493
    %v705 = vunpack.c.l.b16 %v494
    %v706 = vunpack.c.h.b16 %v494
    %v707 = vunpack.c.l.b16 %v495
    %v708 = vunpack.c.h.b16 %v495
    %v709 = vunpack.c.l.b16 %v496
    %v710 = vunpack.c.h.b16 %v496
    %v711 = vunpack.c.l.b16 %v497
    %v712 = vunpack.c.h.b16 %v497
    %v713 = vunpack.c.l.b16 %v498
    %v714 = vunpack.c.h.b16 %v498
    %v715 = vunpack.c.l.b16 %v499
    %v716 = vunpack.c.h.b16 %v499
    %v717 = vunpack.c.l.b16 %v500
    %v718 = vunpack.c.h.b16 %v500
    %v719 = vunpack.c.l.b16 %v501
    %v720 = vunpack.c.h.b16 %v501
    %v721 = vunpack.c.l.b16 %v502
    %v722 = vunpack.c.h.b16 %v502
    %v723 = vunpack.c.l.b16 %v503
    %v724 = vunpack.c.h.b16 %v503
    %v725 = vunpack.c.l.b16 %v504
    %v726 = vunpack.c.h.b16 %v504
    %v727 = vunpack.c.l.b16 %v505
    %v728 = vunpack.c.h.b16 %v505
    %v729 = vunpack.c.l.b16 %v506
    %v730 = vunpack.c.h.b16 %v506
    %v731 = vunpack.c.l.b16 %v507
    %v732 = vunpack.c.h.b16 %v507
    %v733 = vunpack.c.l.b16 %v508
    %v734 = vunpack.c.h.b16 %v508
    %v735 = vunpack.c.l.b16 %v509
    %v736 = vunpack.c.h.b16 %v509
    %v737 = vunpack.c.l.b16 %v510
    %v738 = vunpack.c.h.b16 %v510
    %v739 = vunpack.c.l.b16 %v511
    %v740 = vunpack.c.h.b16 %v511
    %v741 = vunpack.c.l.b16 %v512
    %v742 = vunpack.c.h.b16 %v512
    %v743 = vunpack.c.l.b16 %v513
    %v744 = vunpack.c.h.b16 %v513
    %v745 = vunpack.c.l.b16 %v514
    %v746 = vunpack.c.h.b16 %v514
    %v747 = vunpack.c.l.b16 %v515
    %v748 = vunpack.c.h.b16 %v515
    %v749 = vunpack.c.l.b16 %v516
    %v750 = vunpack.c.h.b16 %v516
    %v751 = vpack.c.b16 %v631, %v623
    %v752 = vpack.c.b16 %v632, %v624
    %v753 = vpack.c.b16 %v633, %v625
    %v754 = vpack.c.b16 %v634, %v626
    %v755 = vpack.c.b16 %v635, %v627
    %v756 = vpack.c.b16 %v636, %v628
    %v757 = vpack.c.b16 %v637, %v629
    %v758 = vpack.c.b16 %v638, %v630
    %v759 = vpack.c.b16 %v647, %v639
    %v760 = vpack.c.b16 %v648, %v640
    %v761 = vpack.c.b16 %v649, %v641
    %v762 = vpack.c.b16 %v650, %v642
    %v763 = vpack.c.b16 %v651, %v643
    %v764 = vpack.c.b16 %v652, %v644
    %v765 = vpack.c.b16 %v653, %v645
    %v766 = vpack.c.b16 %v654, %v646
    %v767 = vpack.c.b16 %v663, %v655
    %v768 = vpack.c.b16 %v664, %v656
    %v769 = vpack.c.b16 %v665, %v657
    %v770 = vpack.c.b16 %v666, %v658
    %v771 = vpack.c.b16 %v667, %v659
    %v772 = vpack.c.b16 %v668, %v660
    %v773 = vpack.c.b16 %v669, %v661
    %v774 = vpack.c.b16 %v670, %v662
    %v775 = vpack.c.b16 %v679, %v671
    %v776 = vpack.c.b16 %v680, %v672
    %v777 = vpack.c.b16 %v681, %v673
    %v778 = vpack.c.b16 %v682, %v674
    %v779 = vpack.c.b16 %v683, %v675
    %v780 = vpack.c.b16 %v684, %v676
    %v781 = vpack.c.b16 %v685, %v677
    %v782 = vpack.c.b16 %v686, %v678
    %v783 = vpack.c.b16 %v695, %v687
    %v784 = vpack.c.b16 %v696, %v688
    %v785 = vpack.c.b16 %v697, %v689
    %v786 = vpack.c.b16 %v698, %v690
    %v787 = vpack.c.b16 %v699, %v691
    %v788 = vpack.c.b16 %v700, %v692
    %v789 = vpack.c.b16 %v701, %v693
    %v790 = vpack.c.b16 %v702, %v694
    %v791 = vpack.c.b16 %v711, %v703
    %v792 = vpack.c.b16 %v712, %v704
    %v793 = vpack.c.b16 %v713, %v705
    %v794 = vpack.c.b16 %v714, %v706
    %v795 = vpack.c.b16 %v715, %v707
    %v796 = vpack.c.b16 %v716, %v708
    %v797 = vpack.c.b16 %v717, %v709
    %v798 = vpack.c.b16 %v718, %v710
    %v799 = vpack.c.b16 %v727, %v719
    %v800 = vpack.c.b16 %v728, %v720
    %v801 = vpack.c.b16 %v729, %v721
    %v802 = vpack.c.b16 %v730, %v722
    %v803 = vpack.c.b16 %v731, %v723
    %v804 = vpack.c.b16 %v732, %v724
    %v805 = vpack.c.b16 %v733, %v725
    %v806 = vpack.c.b16 %v734, %v726
    %v807 = vpack.c.b16 %v743, %v735
    %v808 = vpack.c.b16 %v744, %v736
    %v809 = vpack.c.b16 %v745, %v737
    %v810 = vpack.c.b16 %v746, %v738
    %v811 = vpack.c.b16 %v747, %v739
    %v812 = vpack.c.b16 %v748, %v740
    %v813 = vpack.c.b16 %v749, %v741
    %v814 = vpack.c.b16 %v750, %v742
    %879 = vmatprep.subr.bf16.mxu0 %v808
    %880 = vmatpush1.bf16.msra.mxu0 %v807
    %881 = vmatprep.subr.bf16.mxu0 %v800
    %882 = vmatpush1.bf16.msra.mxu0 %v799
    %883 = vmatprep.subr.bf16.mxu0 %v792
    %884 = vmatpush1.bf16.msra.mxu0 %v791
    %885 = vmatprep.subr.bf16.mxu0 %v784
    %886 = vmatpush1.bf16.msra.mxu0 %v783
    %887 = vmatprep.subr.bf16.mxu0 %v776
    %888 = vmatpush1.bf16.msra.mxu0 %v775
    %889 = vmatprep.subr.bf16.mxu0 %v768
    %890 = vmatpush1.bf16.msra.mxu0 %v767
    %891 = vmatprep.subr.bf16.mxu0 %v760
    %892 = vmatpush1.bf16.msra.mxu0 %v759
    %893 = vmatprep.subr.bf16.mxu0 %v752
    %894 = vmatpush1.bf16.msra.mxu0 %v751
    %895 = vmatprep.subr.bf16.mxu0 0
    %896 = vmatpush2.bf16.msra.mxu0 0
    %897 = vmatprep.subr.bf16.mxu0 0
    %898 = vmatpush2.bf16.msra.mxu0 0
    %899 = vmatprep.subr.bf16.mxu0 0
    %900 = vmatpush2.bf16.msra.mxu0 0
    %901 = vmatprep.subr.bf16.mxu0 0
    %902 = vmatpush2.bf16.msra.mxu0 0
    %903 = vmatprep.subr.bf16.mxu0 0
    %904 = vmatpush2.bf16.msra.mxu0 0
    %905 = vmatprep.subr.bf16.mxu0 0
    %906 = vmatpush2.bf16.msra.mxu0 0
    %907 = vmatprep.subr.bf16.mxu0 0
    %908 = vmatpush2.bf16.msra.mxu0 0
    %909 = vmatprep.subr.bf16.mxu0 0
    %910 = vmatpush2.bf16.msra.mxu0 0
    %911 = vmatprep.mubr.bf16.mxu0 0
    %912 = vmatmul.mubr.bf16.gmra.mxu0 %v452
    %v913 = vpop.f32.mrf.mxu0
    %v914 = vadd.f32 %v522, %v913
    %v915 = vpop.f32.mrf.mxu0
    %v916 = vadd.f32 %v526, %v915
    %v917 = vpop.f32.mrf.mxu0
    %v918 = vpop.f32.mrf.mxu0
    %919 = vdwg.mxu0
    %920 = vmatprep.subr.bf16.mxu0 %v810
    %921 = vmatpush1.bf16.msra.mxu0 %v809
    %922 = vmatprep.subr.bf16.mxu0 %v802
    %923 = vmatpush1.bf16.msra.mxu0 %v801
    %924 = vmatprep.subr.bf16.mxu0 %v794
    %925 = vmatpush1.bf16.msra.mxu0 %v793
    %926 = vmatprep.subr.bf16.mxu0 %v786
    %927 = vmatpush1.bf16.msra.mxu0 %v785
    %928 = vmatprep.subr.bf16.mxu0 %v778
    %929 = vmatpush1.bf16.msra.mxu0 %v777
    %930 = vmatprep.subr.bf16.mxu0 %v770
    %931 = vmatpush1.bf16.msra.mxu0 %v769
    %932 = vmatprep.subr.bf16.mxu0 %v762
    %933 = vmatpush1.bf16.msra.mxu0 %v761
    %934 = vmatprep.subr.bf16.mxu0 %v754
    %935 = vmatpush1.bf16.msra.mxu0 %v753
    %936 = vmatprep.subr.bf16.mxu0 0
    %937 = vmatpush2.bf16.msra.mxu0 0
    %938 = vmatprep.subr.bf16.mxu0 0
    %939 = vmatpush2.bf16.msra.mxu0 0
    %940 = vmatprep.subr.bf16.mxu0 0
    %941 = vmatpush2.bf16.msra.mxu0 0
    %942 = vmatprep.subr.bf16.mxu0 0
    %943 = vmatpush2.bf16.msra.mxu0 0
    %944 = vmatprep.subr.bf16.mxu0 0
    %945 = vmatpush2.bf16.msra.mxu0 0
    %946 = vmatprep.subr.bf16.mxu0 0
    %947 = vmatpush2.bf16.msra.mxu0 0
    %948 = vmatprep.subr.bf16.mxu0 0
    %949 = vmatpush2.bf16.msra.mxu0 0
    %950 = vmatprep.subr.bf16.mxu0 0
    %951 = vmatpush2.bf16.msra.mxu0 0
    %952 = vmatprep.mubr.bf16.mxu0 0
    %953 = vmatmul.mubr.bf16.gmra.mxu0 %v452
    %v954 = vpop.f32.mrf.mxu0
    %v955 = vadd.f32 %v530, %v954
    %v956 = vpop.f32.mrf.mxu0
    %v957 = vadd.f32 %v534, %v956
    %v958 = vpop.f32.mrf.mxu0
    %v959 = vpop.f32.mrf.mxu0
    %960 = vdwg.mxu0
    %961 = vmatprep.subr.bf16.mxu0 %v812
    %962 = vmatpush1.bf16.msra.mxu0 %v811
    %963 = vmatprep.subr.bf16.mxu0 %v804
    %964 = vmatpush1.bf16.msra.mxu0 %v803
    %965 = vmatprep.subr.bf16.mxu0 %v796
    %966 = vmatpush1.bf16.msra.mxu0 %v795
    %967 = vmatprep.subr.bf16.mxu0 %v788
    %968 = vmatpush1.bf16.msra.mxu0 %v787
    %969 = vmatprep.subr.bf16.mxu0 %v780
    %970 = vmatpush1.bf16.msra.mxu0 %v779
    %971 = vmatprep.subr.bf16.mxu0 %v772
    %972 = vmatpush1.bf16.msra.mxu0 %v771
    %973 = vmatprep.subr.bf16.mxu0 %v764
    %974 = vmatpush1.bf16.msra.mxu0 %v763
    %975 = vmatprep.subr.bf16.mxu0 %v756
    %976 = vmatpush1.bf16.msra.mxu0 %v755
    %977 = vmatprep.subr.bf16.mxu0 0
    %978 = vmatpush2.bf16.msra.mxu0 0
    %979 = vmatprep.subr.bf16.mxu0 0
    %980 = vmatpush2.bf16.msra.mxu0 0
    %981 = vmatprep.subr.bf16.mxu0 0
    %982 = vmatpush2.bf16.msra.mxu0 0
    %983 = vmatprep.subr.bf16.mxu0 0
    %984 = vmatpush2.bf16.msra.mxu0 0
    %985 = vmatprep.subr.bf16.mxu0 0
    %986 = vmatpush2.bf16.msra.mxu0 0
    %987 = vmatprep.subr.bf16.mxu0 0
    %988 = vmatpush2.bf16.msra.mxu0 0
    %989 = vmatprep.subr.bf16.mxu0 0
    %990 = vmatpush2.bf16.msra.mxu0 0
    %991 = vmatprep.subr.bf16.mxu0 0
    %992 = vmatpush2.bf16.msra.mxu0 0
    %993 = vmatprep.mubr.bf16.mxu0 0
    %994 = vmatmul.mubr.bf16.gmra.mxu0 %v452
    %v995 = vpop.f32.mrf.mxu0
    %v996 = vadd.f32 %v538, %v995
    %v997 = vpop.f32.mrf.mxu0
    %v998 = vadd.f32 %v542, %v997
    %v999 = vpop.f32.mrf.mxu0
    %v1000 = vpop.f32.mrf.mxu0
    %1001 = vdwg.mxu0
    %1002 = vmatprep.subr.bf16.mxu0 %v814
    %1003 = vmatpush1.bf16.msra.mxu0 %v813
    %1004 = vmatprep.subr.bf16.mxu0 %v806
    %1005 = vmatpush1.bf16.msra.mxu0 %v805
    %1006 = vmatprep.subr.bf16.mxu0 %v798
    %1007 = vmatpush1.bf16.msra.mxu0 %v797
    %1008 = vmatprep.subr.bf16.mxu0 %v790
    %1009 = vmatpush1.bf16.msra.mxu0 %v789
    %1010 = vmatprep.subr.bf16.mxu0 %v782
    %1011 = vmatpush1.bf16.msra.mxu0 %v781
    %1012 = vmatprep.subr.bf16.mxu0 %v774
    %1013 = vmatpush1.bf16.msra.mxu0 %v773
    %1014 = vmatprep.subr.bf16.mxu0 %v766
    %1015 = vmatpush1.bf16.msra.mxu0 %v765
    %1016 = vmatprep.subr.bf16.mxu0 %v758
    %1017 = vmatpush1.bf16.msra.mxu0 %v757
    %1018 = vmatprep.subr.bf16.mxu0 0
    %1019 = vmatpush2.bf16.msra.mxu0 0
    %1020 = vmatprep.subr.bf16.mxu0 0
    %1021 = vmatpush2.bf16.msra.mxu0 0
    %1022 = vmatprep.subr.bf16.mxu0 0
    %1023 = vmatpush2.bf16.msra.mxu0 0
    %1024 = vmatprep.subr.bf16.mxu0 0
    %1025 = vmatpush2.bf16.msra.mxu0 0
    %1026 = vmatprep.subr.bf16.mxu0 0
    %1027 = vmatpush2.bf16.msra.mxu0 0
    %1028 = vmatprep.subr.bf16.mxu0 0
    %1029 = vmatpush2.bf16.msra.mxu0 0
    %1030 = vmatprep.subr.bf16.mxu0 0
    %1031 = vmatpush2.bf16.msra.mxu0 0
    %1032 = vmatprep.subr.bf16.mxu0 0
    %1033 = vmatpush2.bf16.msra.mxu0 0
    %1034 = vmatprep.mubr.bf16.mxu0 0
    %1035 = vmatmul.mubr.bf16.gmra.mxu0 %v452
    %v1036 = vpop.f32.mrf.mxu0
    %v1037 = vadd.f32 %v546, %v1036
    %v1038 = vpop.f32.mrf.mxu0
    %v1039 = vadd.f32 %v550, %v1038
    %v1040 = vpop.f32.mrf.mxu0
    %v1041 = vpop.f32.mrf.mxu0
    %1042 = vdwg.mxu0
    %v1043 = vtanh.pop %v914
    %v1044 = vtanh.pop %v916
    %v1045 = vtanh.pop %v955
    %v1046 = vtanh.pop %v957
    %v1047 = vtanh.pop %v996
    %v1048 = vtanh.pop %v998
    %v1049 = vtanh.pop %v1037
    %v1050 = vtanh.pop %v1039
    %v1051 = vpack.c.bf16 %v1043, %v1043
    %v1052 = vpack.c.bf16 %v1044, %v1044
    %v1053 = vpack.c.bf16 %v1045, %v1045
    %v1054 = vpack.c.bf16 %v1046, %v1046
    %v1055 = vpack.c.bf16 %v1047, %v1047
    %v1056 = vpack.c.bf16 %v1048, %v1048
    %v1057 = vpack.c.bf16 %v1049, %v1049
    %v1058 = vpack.c.bf16 %v1050, %v1050
    %v1067 = vunpack.c.l.b16 %v1051
    %v1068 = vunpack.c.l.b16 %v1052
    %v1069 = vunpack.c.l.b16 %v1053
    %v1070 = vunpack.c.l.b16 %v1054
    %v1071 = vunpack.c.l.b16 %v1055
    %v1072 = vunpack.c.l.b16 %v1056
    %v1073 = vunpack.c.l.b16 %v1057
    %v1074 = vunpack.c.l.b16 %v1058
    %v1075 = vpack.c.b16 %v1068, %v1067
    %v1076 = vpack.c.b16 %v1070, %v1069
    %v1077 = vpack.c.b16 %v1072, %v1071
    %v1078 = vpack.c.b16 %v1074, %v1073
    %1083 = vst [vmem:[%s9] sm:$0xff] %v1075
    %1084 = vst [vmem:[%s9 + $0x8] sm:$0xff] %v1076
    %1085 = vst [vmem:[%s9 + $0x10] sm:$0xff] %v1077
    %1086 = vst [vmem:[%s9 + $0x18] sm:$0xff] %v1078
    // Predicated region
    $region54: #{generator_mlp_forward.1} parent=1 // pred_check
      _
    $region55: #{generator_mlp_forward.1} parent=1 // pred_check_branch
      %1088 = sbr.rel (0) target = $region57
    $region56: #{generator_mlp_forward.1} parent=1 // pred_region
      _
    $region57: #{generator_mlp_forward.1} parent=1 // pred_fallthru
      _
    // Predicated region
    $region58: #{generator_mlp_forward.1} parent=1 // pred_check
      _
    $region59: #{generator_mlp_forward.1} parent=1 // pred_check_branch
      %1090 = sbr.rel (0) target = $region61
    $region60: #{generator_mlp_forward.1} parent=1 // pred_region
      _
    $region61: #{generator_mlp_forward.1} parent=1 // pred_fallthru
      _
    %1091 = vsyncpa [#allocation3], 1
    %1092 = vsyncpa [#allocation5], 1
    %1093 = vsyncpa [#allocation8], 1

</llo_original>
